<compile_context>
chip_gen: v7x
topology: tpu7x:2x2x1
jax: 0.10.0
libtpu: 0.0.40
codegen_flags: <defaults>
</compile_context>

<pallas_src>
import jax
import jax.numpy as jnp
from jax.experimental import pallas as pl
from jax.experimental.pallas import tpu as pltpu


def _round_up(x, m):
    return (x + m - 1) // m * m


def _fused_mlp_kernel(x_ref, w1_ref, b1_ref, w2_ref, b2_ref,
                      w3_ref, b3_ref, w4_ref, b4_ref, o_ref):
    """One batch tile of the whole network; weights stay resident in VMEM."""
    # fc1 + ReLU: bf16 MXU operands, f32 accumulation, f32 VPU for bias/ReLU.
    h = jnp.dot(x_ref[...].astype(jnp.bfloat16), w1_ref[...],
                preferred_element_type=jnp.float32)
    h = jnp.maximum(h + b1_ref[...], 0.0)
    # fc2 + ReLU.
    h = jnp.dot(h.astype(jnp.bfloat16), w2_ref[...],
                preferred_element_type=jnp.float32)
    h = jnp.maximum(h + b2_ref[...], 0.0)
    # fc3 + ReLU.
    h = jnp.dot(h.astype(jnp.bfloat16), w3_ref[...],
                preferred_element_type=jnp.float32)
    h = jnp.maximum(h + b3_ref[...], 0.0)
    # fc4 (out_features == 1): VPU elementwise multiply with the lane-dense
    # (1, half) weight row + XLU lane reduction, all in f32.  Only the final
    # (TILE_M, 1) store is narrow, which is unavoidable.
    y = jnp.sum(h * w4_ref[...].astype(jnp.float32), axis=-1, keepdims=True)
    o_ref[...] = (y + b4_ref[...]).astype(o_ref.dtype)


def net_forward(params, x, *, tile_m_max=256):
    """Pallas implementation of Net.forward as a single fused kernel."""
    M, y_dim = x.shape
    u_dim = params["w1"].shape[1]
    half = params["w2"].shape[1]
    assert params["w1"].shape == (y_dim, u_dim)
    assert params["w3"].shape == (half, half)
    assert params["w4"].shape == (half, 1)

    LANE = 128
    y_p = _round_up(y_dim, LANE)
    u_p = _round_up(u_dim, LANE)
    h_p = _round_up(half, LANE)

    def pad2(a, rows, cols):
        return jnp.pad(a, ((0, rows - a.shape[0]), (0, cols - a.shape[1])))

    # Zero-pad feature dims once and quantize weights to bf16 (zero rows/cols
    # contribute nothing, so forward semantics are unchanged up to bf16).
    w1 = pad2(params["w1"], y_p, u_p).astype(jnp.bfloat16)
    w2 = pad2(params["w2"], u_p, h_p).astype(jnp.bfloat16)
    w3 = pad2(params["w3"], h_p, h_p).astype(jnp.bfloat16)
    w4 = pad2(params["w4"].reshape(1, half), 1, h_p).astype(jnp.bfloat16)
    b1 = jnp.pad(params["b1"], (0, u_p - u_dim)).reshape(1, u_p)
    b2 = jnp.pad(params["b2"], (0, h_p - half)).reshape(1, h_p)
    b3 = jnp.pad(params["b3"], (0, h_p - half)).reshape(1, h_p)
    b4 = params["b4"].reshape(1, 1)

    # Batch tiling: tail handled by zero-padding M up to a tile multiple.
    tile_m = min(tile_m_max, _round_up(M, 8))
    m_p = _round_up(M, tile_m)
    x_p = jnp.pad(x, ((0, m_p - M), (0, y_p - y_dim)))
    grid = (m_p // tile_m,)

    rep = lambda i: (0, 0)  # weights/biases: same block every step -> resident
    in_specs = [
        pl.BlockSpec((tile_m, y_p), lambda i: (i, 0)),   # x tile
        pl.BlockSpec((y_p, u_p), rep), pl.BlockSpec((1, u_p), rep),  # fc1
        pl.BlockSpec((u_p, h_p), rep), pl.BlockSpec((1, h_p), rep),  # fc2
        pl.BlockSpec((h_p, h_p), rep), pl.BlockSpec((1, h_p), rep),  # fc3
        pl.BlockSpec((1, h_p), rep), pl.BlockSpec((1, 1), rep),      # fc4
    ]
    out_spec = pl.BlockSpec((tile_m, 1), lambda i: (i, 0))

    # Scoped-VMEM budget: resident weights (x2 for pipelining buffers) + a few
    # batch-tile-sized activations + headroom; clamped to a sane range.
    weight_bytes = 2 * (w1.size + w2.size + w3.size + w4.size) \
        + 4 * (b1.size + b2.size + b3.size + b4.size)
    act_bytes = tile_m * (y_p + u_p + 2 * h_p + 1) * 4
    vmem_limit = int(2 * weight_bytes + 4 * act_bytes + (8 << 20))
    vmem_limit = max(32 << 20, min(vmem_limit, 100 << 20))

    flops = 2 * m_p * (y_p * u_p + u_p * h_p + h_p * h_p + h_p)
    bytes_accessed = int(weight_bytes + m_p * (y_p + 1) * 4)
    cost = pl.CostEstimate(flops=flops, transcendentals=0,
                           bytes_accessed=bytes_accessed)

    out = pl.pallas_call(
        _fused_mlp_kernel,
        out_shape=jax.ShapeDtypeStruct((m_p, 1), x.dtype),
        grid=grid,
        in_specs=in_specs,
        out_specs=out_spec,
        compiler_params=pltpu.CompilerParams(
            dimension_semantics=("parallel",),
            vmem_limit_bytes=vmem_limit,
        ),
        cost_estimate=cost,
    )(x_p, w1, b1, w2, b2, w3, b3, w4, b4)
    return out[:M]


def init_params(key, y_dim, u_dim):
    """Deterministic init matching nn.Linear's default U(-1/sqrt(fan_in), ...)."""
    half = u_dim // 2
    dims = [(y_dim, u_dim), (u_dim, half), (half, half), (half, 1)]
    params = {}
    for idx, (fan_in, fan_out) in enumerate(dims, start=1):
        key, kw, kb = jax.random.split(key, 3)
        bound = 1.0 / jnp.sqrt(jnp.float32(fan_in))
        # Stored [in, out] so the kernel can do x @ W directly.
        params[f"w{idx}"] = jax.random.uniform(
            kw, (fan_in, fan_out), jnp.float32, minval=-bound, maxval=bound
        )
        params[f"b{idx}"] = jax.random.uniform(
            kb, (fan_out,), jnp.float32, minval=-bound, maxval=bound
        )
    return params


def _reference_forward(params, x):
    """Plain-JAX reference mirroring the kernel's bf16-weight quantization."""
    h = x
    for i in (1, 2, 3):
        w = params[f"w{i}"].astype(jnp.bfloat16)
        h = jnp.dot(h.astype(jnp.bfloat16), w,
                    preferred_element_type=jnp.float32)
        h = jnp.maximum(h + params[f"b{i}"], 0.0)
    w4 = params["w4"].astype(jnp.bfloat16).astype(jnp.float32)
    return jnp.dot(h, w4) + params["b4"]


if __name__ == "__main__":
    # Small shapes consistent with the module (u scaled down 5000 -> 256).
    # NOTE: at M=8 the kernel is pure weight-DMA; batch in the several-hundreds
    # range is what approaches the MXU roofline at the real model size.
    BATCH = 8
    Y_DIM = 128     # "y" input feature dim
    U_DIM = 256     # "u" hidden dim (u/2 = 128)

    key = jax.random.PRNGKey(0)
    key, kx = jax.random.split(key)
    params = init_params(key, Y_DIM, U_DIM)
    x = jax.random.normal(kx, (BATCH, Y_DIM), jnp.float32)

    out = jax.block_until_ready(net_forward(params, x))

    ref = _reference_forward(params, x)
    assert out.shape == (BATCH, 1), out.shape
    assert jnp.allclose(out, ref, atol=2e-2, rtol=2e-2), float(
        jnp.max(jnp.abs(out - ref))
    )

    print("KERNEL_OK")
</pallas_src>

<mosaic_0001>
module attributes {stable_mosaic.version = 11 : i64} {
  func.func @_fused_mlp_kernel(%arg0: i32, %arg1: memref<8x128xf32, #tpu.memory_space<vmem>>, %arg2: memref<128x256xbf16, #tpu.memory_space<vmem>>, %arg3: memref<1x256xf32, #tpu.memory_space<vmem>>, %arg4: memref<256x128xbf16, #tpu.memory_space<vmem>>, %arg5: memref<1x128xf32, #tpu.memory_space<vmem>>, %arg6: memref<128x128xbf16, #tpu.memory_space<vmem>>, %arg7: memref<1x128xf32, #tpu.memory_space<vmem>>, %arg8: memref<1x128xbf16, #tpu.memory_space<vmem>>, %arg9: memref<1x1xf32, #tpu.memory_space<vmem>>, %arg10: memref<8x1xf32, #tpu.memory_space<vmem>>) attributes {dimension_semantics = [#tpu.dimension_semantics<parallel>], iteration_bounds = array<i64: 1>, scalar_prefetch = 0 : i64, scratch_operands = 0 : i64, tpu.core_type = #tpu.core_type<tc>, window_params = [{transform_indices = @transform_0, window_bounds = array<i64: 8, 128>}, {pipeline_mode = #tpu.pipeline_mode<synchronous>, transform_indices = @transform_1, window_bounds = array<i64: 128, 256>}, {pipeline_mode = #tpu.pipeline_mode<synchronous>, transform_indices = @transform_2, window_bounds = array<i64: 1, 256>}, {pipeline_mode = #tpu.pipeline_mode<synchronous>, transform_indices = @transform_3, window_bounds = array<i64: 256, 128>}, {pipeline_mode = #tpu.pipeline_mode<synchronous>, transform_indices = @transform_4, window_bounds = array<i64: 1, 128>}, {pipeline_mode = #tpu.pipeline_mode<synchronous>, transform_indices = @transform_5, window_bounds = array<i64: 128, 128>}, {pipeline_mode = #tpu.pipeline_mode<synchronous>, transform_indices = @transform_6, window_bounds = array<i64: 1, 128>}, {pipeline_mode = #tpu.pipeline_mode<synchronous>, transform_indices = @transform_7, window_bounds = array<i64: 1, 128>}, {pipeline_mode = #tpu.pipeline_mode<synchronous>, transform_indices = @transform_8, window_bounds = array<i64: 1, 1>}, {transform_indices = @transform_9, window_bounds = array<i64: 8, 1>}]} {
    %c0 = arith.constant 0 : index
    %c0_0 = arith.constant 0 : index
    %0 = vector.load %arg1[%c0, %c0_0] : memref<8x128xf32, #tpu.memory_space<vmem>>, vector<8x128xf32>
    %1 = arith.truncf %0 : vector<8x128xf32> to vector<8x128xbf16>
    %c0_1 = arith.constant 0 : index
    %c0_2 = arith.constant 0 : index
    %2 = vector.load %arg2[%c0_1, %c0_2] : memref<128x256xbf16, #tpu.memory_space<vmem>>, vector<128x256xbf16>
    %cst = arith.constant dense<0.000000e+00> : vector<8x256xf32>
    %3 = tpu.matmul %1, %2, %cst {dimension_numbers = #tpu.dot_dimension_numbers<[1], [0], [0], [1], [0, 0, 1, 1], [], []>} : vector<8x128xbf16>, vector<128x256xbf16>, vector<8x256xf32> -> vector<8x256xf32>
    %c0_3 = arith.constant 0 : index
    %c0_4 = arith.constant 0 : index
    %4 = vector.load %arg3[%c0_3, %c0_4] : memref<1x256xf32, #tpu.memory_space<vmem>>, vector<1x256xf32>
    %5 = vector.broadcast %4 : vector<1x256xf32> to vector<8x256xf32>
    %6 = arith.addf %3, %5 : vector<8x256xf32>
    %cst_5 = arith.constant 0.000000e+00 : f32
    %7 = vector.broadcast %cst_5 : f32 to vector<8x256xf32>
    %8 = arith.maximumf %6, %7 : vector<8x256xf32>
    %9 = arith.truncf %8 : vector<8x256xf32> to vector<8x256xbf16>
    %c0_6 = arith.constant 0 : index
    %c0_7 = arith.constant 0 : index
    %10 = vector.load %arg4[%c0_6, %c0_7] : memref<256x128xbf16, #tpu.memory_space<vmem>>, vector<256x128xbf16>
    %cst_8 = arith.constant dense<0.000000e+00> : vector<8x128xf32>
    %11 = tpu.matmul %9, %10, %cst_8 {dimension_numbers = #tpu.dot_dimension_numbers<[1], [0], [0], [1], [0, 0, 1, 1], [], []>} : vector<8x256xbf16>, vector<256x128xbf16>, vector<8x128xf32> -> vector<8x128xf32>
    %c0_9 = arith.constant 0 : index
    %c0_10 = arith.constant 0 : index
    %12 = vector.load %arg5[%c0_9, %c0_10] : memref<1x128xf32, #tpu.memory_space<vmem>>, vector<1x128xf32>
    %13 = vector.broadcast %12 : vector<1x128xf32> to vector<8x128xf32>
    %14 = arith.addf %11, %13 : vector<8x128xf32>
    %cst_11 = arith.constant 0.000000e+00 : f32
    %15 = vector.broadcast %cst_11 : f32 to vector<8x128xf32>
    %16 = arith.maximumf %14, %15 : vector<8x128xf32>
    %17 = arith.truncf %16 : vector<8x128xf32> to vector<8x128xbf16>
    %c0_12 = arith.constant 0 : index
    %c0_13 = arith.constant 0 : index
    %18 = vector.load %arg6[%c0_12, %c0_13] : memref<128x128xbf16, #tpu.memory_space<vmem>>, vector<128x128xbf16>
    %cst_14 = arith.constant dense<0.000000e+00> : vector<8x128xf32>
    %19 = tpu.matmul %17, %18, %cst_14 {dimension_numbers = #tpu.dot_dimension_numbers<[1], [0], [0], [1], [0, 0, 1, 1], [], []>} : vector<8x128xbf16>, vector<128x128xbf16>, vector<8x128xf32> -> vector<8x128xf32>
    %c0_15 = arith.constant 0 : index
    %c0_16 = arith.constant 0 : index
    %20 = vector.load %arg7[%c0_15, %c0_16] : memref<1x128xf32, #tpu.memory_space<vmem>>, vector<1x128xf32>
    %21 = vector.broadcast %20 : vector<1x128xf32> to vector<8x128xf32>
    %22 = arith.addf %19, %21 : vector<8x128xf32>
    %cst_17 = arith.constant 0.000000e+00 : f32
    %23 = vector.broadcast %cst_17 : f32 to vector<8x128xf32>
    %24 = arith.maximumf %22, %23 : vector<8x128xf32>
    %c0_18 = arith.constant 0 : index
    %c0_19 = arith.constant 0 : index
    %25 = vector.load %arg8[%c0_18, %c0_19] : memref<1x128xbf16, #tpu.memory_space<vmem>>, vector<1x128xbf16>
    %26 = arith.extf %25 : vector<1x128xbf16> to vector<1x128xf32>
    %27 = vector.broadcast %26 : vector<1x128xf32> to vector<8x128xf32>
    %28 = arith.mulf %24, %27 : vector<8x128xf32>
    %cst_20 = arith.constant dense<0.000000e+00> : vector<8xf32>
    %29 = vector.multi_reduction <add>, %28, %cst_20 [1] : vector<8x128xf32> to vector<8xf32>
    %30 = vector.shape_cast %29 : vector<8xf32> to vector<8x1xf32>
    %c0_21 = arith.constant 0 : index
    %c0_22 = arith.constant 0 : index
    %31 = vector.load %arg9[%c0_21, %c0_22] : memref<1x1xf32, #tpu.memory_space<vmem>>, vector<1x1xf32>
    %32 = vector.broadcast %31 : vector<1x1xf32> to vector<8x1xf32>
    %33 = arith.addf %30, %32 : vector<8x1xf32>
    %c0_23 = arith.constant 0 : index
    %c0_24 = arith.constant 0 : index
    %34 = vector.load %arg10[%c0_23, %c0_24] : memref<8x1xf32, #tpu.memory_space<vmem>>, vector<8x1xf32>
    tpu.vector_store %arg10[%c0_23, %c0_24], %33 {strides = array<i32>} : memref<8x1xf32, #tpu.memory_space<vmem>>, vector<8x1xf32>,
    return
  }
  func.func @transform_0(%arg0: i32) -> (i32, i32) {
    %c0_i32 = arith.constant 0 : i32
    %c0_i32_0 = arith.constant 0 : i32
    return %arg0, %c0_i32 : i32, i32
  }
  func.func @transform_1(%arg0: i32) -> (i32, i32) {
    %c0_i32 = arith.constant 0 : i32
    %c0_i32_0 = arith.constant 0 : i32
    %c0_i32_1 = arith.constant 0 : i32
    return %c0_i32, %c0_i32_0 : i32, i32
  }
  func.func @transform_2(%arg0: i32) -> (i32, i32) {
    %c0_i32 = arith.constant 0 : i32
    %c0_i32_0 = arith.constant 0 : i32
    %c0_i32_1 = arith.constant 0 : i32
    return %c0_i32, %c0_i32_0 : i32, i32
  }
  func.func @transform_3(%arg0: i32) -> (i32, i32) {
    %c0_i32 = arith.constant 0 : i32
    %c0_i32_0 = arith.constant 0 : i32
    %c0_i32_1 = arith.constant 0 : i32
    return %c0_i32, %c0_i32_0 : i32, i32
  }
  func.func @transform_4(%arg0: i32) -> (i32, i32) {
    %c0_i32 = arith.constant 0 : i32
    %c0_i32_0 = arith.constant 0 : i32
    %c0_i32_1 = arith.constant 0 : i32
    return %c0_i32, %c0_i32_0 : i32, i32
  }
  func.func @transform_5(%arg0: i32) -> (i32, i32) {
    %c0_i32 = arith.constant 0 : i32
    %c0_i32_0 = arith.constant 0 : i32
    %c0_i32_1 = arith.constant 0 : i32
    return %c0_i32, %c0_i32_0 : i32, i32
  }
  func.func @transform_6(%arg0: i32) -> (i32, i32) {
    %c0_i32 = arith.constant 0 : i32
    %c0_i32_0 = arith.constant 0 : i32
    %c0_i32_1 = arith.constant 0 : i32
    return %c0_i32, %c0_i32_0 : i32, i32
  }
  func.func @transform_7(%arg0: i32) -> (i32, i32) {
    %c0_i32 = arith.constant 0 : i32
    %c0_i32_0 = arith.constant 0 : i32
    %c0_i32_1 = arith.constant 0 : i32
    return %c0_i32, %c0_i32_0 : i32, i32
  }
  func.func @transform_8(%arg0: i32) -> (i32, i32) {
    %c0_i32 = arith.constant 0 : i32
    %c0_i32_0 = arith.constant 0 : i32
    %c0_i32_1 = arith.constant 0 : i32
    return %c0_i32, %c0_i32_0 : i32, i32
  }
  func.func @transform_9(%arg0: i32) -> (i32, i32) {
    %c0_i32 = arith.constant 0 : i32
    %c0_i32_0 = arith.constant 0 : i32
    return %arg0, %c0_i32 : i32, i32
  }
}

</mosaic_0001>

<llo_original>
// kernel: tpu_custom_call.1
$region0: #{tpu_custom_call.1}
  #allocation0 [shape = 'u32[]', space=smem, size = 0x4, offset = 0x4, fixed_abs, tag = 'smem constant byte address 0x4 - core index']
  #allocation1 [shape = 'u32[144,128]{1,0:T(1,128)}', space=vmem, size = 0x12000, scoped, tag = 'internal scratch']
  #allocation2 [shape = 'f32[1,1]{1,0:T(1,128)S(1)}', space=vmem, size = 0x200, scoped, tag = 'scoped memory for tpu_custom_call.1']
  %s0 = inlined_call_operand.hbm [shape: f32[8,128], index: 0, kind: input, shape index: {}]
  %s1 = inlined_call_operand.hbm [shape: bf16[128,256], index: 1, kind: input, shape index: {}]
  %s2 = inlined_call_operand.vmem [shape: f32[1,256], index: 2, kind: input, shape index: {}]
  %s3 = inlined_call_operand.hbm [shape: bf16[256,128], index: 3, kind: input, shape index: {}]
  %s4 = inlined_call_operand.vmem [shape: f32[1,128], index: 4, kind: input, shape index: {}]
  %s5 = inlined_call_operand.hbm [shape: bf16[128,128], index: 5, kind: input, shape index: {}]
  %s6 = inlined_call_operand.vmem [shape: f32[1,128], index: 6, kind: input, shape index: {}]
  %s7 = inlined_call_operand.vmem [shape: bf16[1,128], index: 7, kind: input, shape index: {}]
  %s8 = inlined_call_operand.<no memory space> [shape: f32[1,1], index: 8, kind: input, shape index: {}]
  %s9 = inlined_call_operand.vmem [shape: f32[8,1], index: 9, kind: output, shape index: {}]
  %s10 = sld [smem:[#allocation0]]
  $region62: #{tpu_custom_call.1} parent=0
    _
  %s12 = ssub.s32 1, %s10
  %s13 = scalar_select 0, %s12, %s10
  %v14 = vstv %s8
  %15 = vst [vmem:[#allocation2] sm:$0x1] %v14
  $region1: #{tpu_custom_call.1} parent=0
    #allocation3 [shape = 'u8[4096]{0}', space=vmem, size = 0x1000, scoped, tag = 'input window, operand 0, single buffered']
    #allocation4 [shape = 's32[1]{0}', space=sflag, size = 0x4, scoped, tag = 'scoped memory for tpu_custom_call.1']
    #allocation5 [shape = 'u8[65536]{0}', space=vmem, size = 0x10000, scoped, tag = 'input window, operand 1, single buffered']
    #allocation6 [shape = 's32[1]{0}', space=sflag, size = 0x4, scoped, tag = 'scoped memory for tpu_custom_call.1']
    #allocation7 [shape = 'u8[65536]{0}', space=vmem, size = 0x10000, scoped, tag = 'input window, operand 3, single buffered']
    #allocation8 [shape = 'u8[32768]{0}', space=vmem, size = 0x8000, scoped, tag = 'input window, operand 5, single buffered']
    #allocation9 [shape = 's32[1]{0}', space=sflag, size = 0x4, scoped, tag = 'scoped memory for tpu_custom_call.1']
    %16 = vsyncpa [#allocation4], 0
    %17 = vsyncpa [#allocation6], 0
    %18 = vsyncpa [#allocation9], 0
    // Predicated region
    $region2: #{tpu_custom_call.1} parent=1 // pred_check
      _
    $region3: #{tpu_custom_call.1} parent=1 // pred_check_branch
      %20 = sbr.rel (0) target = $region5
    $region4: #{tpu_custom_call.1} parent=1 // pred_region
      %s22 = ssub.s32 128, 128
      %23 = vsyncadd [#allocation4], %s22
      %s25 = sshll.u32 [#allocation3], 4
      %s26 = int_to_ptr.vmem [resolvable:$true] %s25
      %28 = dma.hbm_to_vmem [thread:$0]  %s0, 128, %s26, [#allocation4]
    $region5: #{tpu_custom_call.1} parent=1 // pred_fallthru
      _
    // Predicated region
    $region6: #{tpu_custom_call.1} parent=1 // pred_check
      _
    $region7: #{tpu_custom_call.1} parent=1 // pred_check_branch
      %30 = sbr.rel (0) target = $region9
    $region8: #{tpu_custom_call.1} parent=1 // pred_region
      %s32 = ssub.s32 2048, 2048
      %33 = vsyncadd [#allocation6], %s32
      %s34 = sshll.u32 [#allocation5], 4
      %s35 = int_to_ptr.vmem [resolvable:$true] %s34
      %40 = dma.hbm_to_vmem [thread:$0]  %s1, 2048, %s35, [#allocation6], 128, 128, 8
    $region9: #{tpu_custom_call.1} parent=1 // pred_fallthru
      _
    // Predicated region
    $region10: #{tpu_custom_call.1} parent=1 // pred_check
      _
    $region11: #{tpu_custom_call.1} parent=1 // pred_check_branch
      %42 = sbr.rel (0) target = $region13
    $region12: #{tpu_custom_call.1} parent=1 // pred_region
      _
    $region13: #{tpu_custom_call.1} parent=1 // pred_fallthru
      _
    // Predicated region
    $region14: #{tpu_custom_call.1} parent=1 // pred_check
      _
    $region15: #{tpu_custom_call.1} parent=1 // pred_check_branch
      %44 = sbr.rel (0) target = $region17
    $region16: #{tpu_custom_call.1} parent=1 // pred_region
      %s46 = ssub.s32 2048, 2048
      %47 = vsyncadd [#allocation6], %s46
      %s48 = sshll.u32 [#allocation7], 4
      %s49 = int_to_ptr.vmem [resolvable:$true] %s48
      %54 = dma.hbm_to_vmem [thread:$0]  %s3, 2048, %s49, [#allocation6], 64, 64, 4
    $region17: #{tpu_custom_call.1} parent=1 // pred_fallthru
      _
    // Predicated region
    $region18: #{tpu_custom_call.1} parent=1 // pred_check
      _
    $region19: #{tpu_custom_call.1} parent=1 // pred_check_branch
      %56 = sbr.rel (0) target = $region21
    $region20: #{tpu_custom_call.1} parent=1 // pred_region
      _
    $region21: #{tpu_custom_call.1} parent=1 // pred_fallthru
      _
    // Predicated region
    $region22: #{tpu_custom_call.1} parent=1 // pred_check
      _
    $region23: #{tpu_custom_call.1} parent=1 // pred_check_branch
      %58 = sbr.rel (0) target = $region25
    $region24: #{tpu_custom_call.1} parent=1 // pred_region
      %s60 = ssub.s32 1024, 1024
      %61 = vsyncadd [#allocation9], %s60
      %s62 = sshll.u32 [#allocation8], 4
      %s63 = int_to_ptr.vmem [resolvable:$true] %s62
      %68 = dma.hbm_to_vmem [thread:$0]  %s5, 1024, %s63, [#allocation9], 64, 64, 4
    $region25: #{tpu_custom_call.1} parent=1 // pred_fallthru
      _
    // Predicated region
    $region26: #{tpu_custom_call.1} parent=1 // pred_check
      _
    $region27: #{tpu_custom_call.1} parent=1 // pred_check_branch
      %70 = sbr.rel (0) target = $region29
    $region28: #{tpu_custom_call.1} parent=1 // pred_region
      _
    $region29: #{tpu_custom_call.1} parent=1 // pred_fallthru
      _
    // Predicated region
    $region30: #{tpu_custom_call.1} parent=1 // pred_check
      _
    $region31: #{tpu_custom_call.1} parent=1 // pred_check_branch
      %72 = sbr.rel (0) target = $region33
    $region32: #{tpu_custom_call.1} parent=1 // pred_region
      _
    $region33: #{tpu_custom_call.1} parent=1 // pred_fallthru
      _
    // Predicated region
    $region34: #{tpu_custom_call.1} parent=1 // pred_check
      _
    $region35: #{tpu_custom_call.1} parent=1 // pred_check_branch
      %74 = sbr.rel (0) target = $region37
    $region36: #{tpu_custom_call.1} parent=1 // pred_region
      _
    $region37: #{tpu_custom_call.1} parent=1 // pred_fallthru
      _
    // Predicated region
    $region38: #{tpu_custom_call.1} parent=1 // pred_check
      _
    $region39: #{tpu_custom_call.1} parent=1 // pred_check_branch
      %76 = sbr.rel (0) target = $region41
    $region40: #{tpu_custom_call.1} parent=1 // pred_region
      %77 = dma.done [#allocation4], 128
    $region41: #{tpu_custom_call.1} parent=1 // pred_fallthru
      _
    // Predicated region
    $region42: #{tpu_custom_call.1} parent=1 // pred_check
      _
    $region43: #{tpu_custom_call.1} parent=1 // pred_check_branch
      %79 = sbr.rel (0) target = $region45
    $region44: #{tpu_custom_call.1} parent=1 // pred_region
      %80 = dma.done [#allocation6], 2048
    $region45: #{tpu_custom_call.1} parent=1 // pred_fallthru
      _
    // Predicated region
    $region46: #{tpu_custom_call.1} parent=1 // pred_check
      _
    $region47: #{tpu_custom_call.1} parent=1 // pred_check_branch
      %82 = sbr.rel (0) target = $region49
    $region48: #{tpu_custom_call.1} parent=1 // pred_region
      %83 = dma.done [#allocation6], 2048
    $region49: #{tpu_custom_call.1} parent=1 // pred_fallthru
      _
    // Predicated region
    $region50: #{tpu_custom_call.1} parent=1 // pred_check
      _
    $region51: #{tpu_custom_call.1} parent=1 // pred_check_branch
      %85 = sbr.rel (0) target = $region53
    $region52: #{tpu_custom_call.1} parent=1 // pred_region
      %86 = dma.done [#allocation9], 1024
    $region53: #{tpu_custom_call.1} parent=1 // pred_fallthru
      _
    %v88 = vld [vmem:[#allocation3] sm:$0xff]
    %v89 = vpack.c.bf16 %v88, %v88
    %v90 = vld [vmem:[#allocation5] sm:$0xff]
    %v91 = vld [vmem:[#allocation5 + $0x8] sm:$0xff]
    %v92 = vld [vmem:[#allocation5 + $0x10] sm:$0xff]
    %v93 = vld [vmem:[#allocation5 + $0x18] sm:$0xff]
    %v94 = vld [vmem:[#allocation5 + $0x20] sm:$0xff]
    %v95 = vld [vmem:[#allocation5 + $0x28] sm:$0xff]
    %v96 = vld [vmem:[#allocation5 + $0x30] sm:$0xff]
    %v97 = vld [vmem:[#allocation5 + $0x38] sm:$0xff]
    %v98 = vld [vmem:[#allocation5 + $0x40] sm:$0xff]
    %v99 = vld [vmem:[#allocation5 + $0x48] sm:$0xff]
    %v100 = vld [vmem:[#allocation5 + $0x50] sm:$0xff]
    %v101 = vld [vmem:[#allocation5 + $0x58] sm:$0xff]
    %v102 = vld [vmem:[#allocation5 + $0x60] sm:$0xff]
    %v103 = vld [vmem:[#allocation5 + $0x68] sm:$0xff]
    %v104 = vld [vmem:[#allocation5 + $0x70] sm:$0xff]
    %v105 = vld [vmem:[#allocation5 + $0x78] sm:$0xff]
    %v106 = vld [vmem:[%s2] sm:$0x3]
    %v108 = vlaneseq
    %v109 = vshrl.u32 %v108, 7
    %v110 = vsub.s32 0, %v109
    %v111 = vrot.slane %v106, %v110
    %v112 = vlaneseq
    %v113 = vshrl.u32 %v112, 7
    %v114 = vsub.s32 1, %v113
    %v115 = vrot.slane %v106, %v114
    %v134 = vunpack.c.l.b16 %v90
    %v135 = vunpack.c.h.b16 %v90
    %v136 = vunpack.c.l.b16 %v91
    %v137 = vunpack.c.h.b16 %v91
    %v138 = vunpack.c.l.b16 %v92
    %v139 = vunpack.c.h.b16 %v92
    %v140 = vunpack.c.l.b16 %v93
    %v141 = vunpack.c.h.b16 %v93
    %v142 = vunpack.c.l.b16 %v94
    %v143 = vunpack.c.h.b16 %v94
    %v144 = vunpack.c.l.b16 %v95
    %v145 = vunpack.c.h.b16 %v95
    %v146 = vunpack.c.l.b16 %v96
    %v147 = vunpack.c.h.b16 %v96
    %v148 = vunpack.c.l.b16 %v97
    %v149 = vunpack.c.h.b16 %v97
    %v150 = vunpack.c.l.b16 %v98
    %v151 = vunpack.c.h.b16 %v98
    %v152 = vunpack.c.l.b16 %v99
    %v153 = vunpack.c.h.b16 %v99
    %v154 = vunpack.c.l.b16 %v100
    %v155 = vunpack.c.h.b16 %v100
    %v156 = vunpack.c.l.b16 %v101
    %v157 = vunpack.c.h.b16 %v101
    %v158 = vunpack.c.l.b16 %v102
    %v159 = vunpack.c.h.b16 %v102
    %v160 = vunpack.c.l.b16 %v103
    %v161 = vunpack.c.h.b16 %v103
    %v162 = vunpack.c.l.b16 %v104
    %v163 = vunpack.c.h.b16 %v104
    %v164 = vunpack.c.l.b16 %v105
    %v165 = vunpack.c.h.b16 %v105
    %v166 = vpack.c.b16 %v136, %v134
    %v167 = vpack.c.b16 %v137, %v135
    %v168 = vpack.c.b16 %v140, %v138
    %v169 = vpack.c.b16 %v141, %v139
    %v170 = vpack.c.b16 %v144, %v142
    %v171 = vpack.c.b16 %v145, %v143
    %v172 = vpack.c.b16 %v148, %v146
    %v173 = vpack.c.b16 %v149, %v147
    %v174 = vpack.c.b16 %v152, %v150
    %v175 = vpack.c.b16 %v153, %v151
    %v176 = vpack.c.b16 %v156, %v154
    %v177 = vpack.c.b16 %v157, %v155
    %v178 = vpack.c.b16 %v160, %v158
    %v179 = vpack.c.b16 %v161, %v159
    %v180 = vpack.c.b16 %v164, %v162
    %v181 = vpack.c.b16 %v165, %v163
    %198 = vmatprep.subr.bf16.mxu0 %v167
    %199 = vmatpush1.bf16.msra.mxu0 %v166
    %200 = vmatprep.subr.bf16.mxu0 %v169
    %201 = vmatpush1.bf16.msra.mxu0 %v168
    %202 = vmatprep.subr.bf16.mxu0 %v171
    %203 = vmatpush1.bf16.msra.mxu0 %v170
    %204 = vmatprep.subr.bf16.mxu0 %v173
    %205 = vmatpush1.bf16.msra.mxu0 %v172
    %206 = vmatprep.subr.bf16.mxu0 %v175
    %207 = vmatpush1.bf16.msra.mxu0 %v174
    %208 = vmatprep.subr.bf16.mxu0 %v177
    %209 = vmatpush1.bf16.msra.mxu0 %v176
    %210 = vmatprep.subr.bf16.mxu0 %v179
    %211 = vmatpush1.bf16.msra.mxu0 %v178
    %212 = vmatprep.subr.bf16.mxu0 %v181
    %213 = vmatpush1.bf16.msra.mxu0 %v180
    %214 = vmatprep.subr.bf16.mxu0 0
    %215 = vmatpush1.bf16.msra.mxu0 0
    %216 = vmatprep.subr.bf16.mxu0 0
    %217 = vmatpush1.bf16.msra.mxu0 0
    %218 = vmatprep.subr.bf16.mxu0 0
    %219 = vmatpush1.bf16.msra.mxu0 0
    %220 = vmatprep.subr.bf16.mxu0 0
    %221 = vmatpush1.bf16.msra.mxu0 0
    %222 = vmatprep.subr.bf16.mxu0 0
    %223 = vmatpush1.bf16.msra.mxu0 0
    %224 = vmatprep.subr.bf16.mxu0 0
    %225 = vmatpush1.bf16.msra.mxu0 0
    %226 = vmatprep.subr.bf16.mxu0 0
    %227 = vmatpush1.bf16.msra.mxu0 0
    %228 = vmatprep.subr.bf16.mxu0 0
    %229 = vmatpush1.bf16.msra.mxu0 0
    %230 = vmatprep.mubr.bf16.mxu0 0
    %231 = vmatmul.mubr.bf16.gmra.mrb[0].mxu0 %v89
    %v232 = vpop.f32.mrb[0].mxu0
    %v233 = vadd.f32 %v111, %v232
    %v234 = vpop.f32.mrb[0].mxu0
    %v235 = vadd.f32 %v115, %v234
    %v236 = vpop.f32.mrb[0].mxu0
    %v237 = vpop.f32.mrb[0].mxu0
    %238 = vdwg.mxu0
    %v239 = vmax.f32 %v233, 0.0
    %v240 = vmax.f32 %v235, 0.0
    %v241 = vpack.c.bf16 %v239, %v239
    %v242 = vpack.c.bf16 %v240, %v240
    %v243 = vld [vmem:[#allocation7] sm:$0xf]
    %v244 = vld [vmem:[#allocation7 + $0x4] sm:$0xf]
    %v245 = vld [vmem:[#allocation7 + $0x8] sm:$0xf]
    %v246 = vld [vmem:[#allocation7 + $0xc] sm:$0xf]
    %v247 = vld [vmem:[#allocation7 + $0x10] sm:$0xf]
    %v248 = vld [vmem:[#allocation7 + $0x14] sm:$0xf]
    %v249 = vld [vmem:[#allocation7 + $0x18] sm:$0xf]
    %v250 = vld [vmem:[#allocation7 + $0x1c] sm:$0xf]
    %v251 = vld [vmem:[#allocation7 + $0x20] sm:$0xf]
    %v252 = vld [vmem:[#allocation7 + $0x24] sm:$0xf]
    %v253 = vld [vmem:[#allocation7 + $0x28] sm:$0xf]
    %v254 = vld [vmem:[#allocation7 + $0x2c] sm:$0xf]
    %v255 = vld [vmem:[#allocation7 + $0x30] sm:$0xf]
    %v256 = vld [vmem:[#allocation7 + $0x34] sm:$0xf]
    %v257 = vld [vmem:[#allocation7 + $0x38] sm:$0xf]
    %v258 = vld [vmem:[#allocation7 + $0x3c] sm:$0xf]
    %v259 = vld [vmem:[#allocation7 + $0x40] sm:$0xf]
    %v260 = vld [vmem:[#allocation7 + $0x44] sm:$0xf]
    %v261 = vld [vmem:[#allocation7 + $0x48] sm:$0xf]
    %v262 = vld [vmem:[#allocation7 + $0x4c] sm:$0xf]
    %v263 = vld [vmem:[#allocation7 + $0x50] sm:$0xf]
    %v264 = vld [vmem:[#allocation7 + $0x54] sm:$0xf]
    %v265 = vld [vmem:[#allocation7 + $0x58] sm:$0xf]
    %v266 = vld [vmem:[#allocation7 + $0x5c] sm:$0xf]
    %v267 = vld [vmem:[#allocation7 + $0x60] sm:$0xf]
    %v268 = vld [vmem:[#allocation7 + $0x64] sm:$0xf]
    %v269 = vld [vmem:[#allocation7 + $0x68] sm:$0xf]
    %v270 = vld [vmem:[#allocation7 + $0x6c] sm:$0xf]
    %v271 = vld [vmem:[#allocation7 + $0x70] sm:$0xf]
    %v272 = vld [vmem:[#allocation7 + $0x74] sm:$0xf]
    %v273 = vld [vmem:[#allocation7 + $0x78] sm:$0xf]
    %v274 = vld [vmem:[#allocation7 + $0x7c] sm:$0xf]
    %v275 = vld [vmem:[%s4] sm:$0x1]
    %v277 = vlaneseq
    %v278 = vshrl.u32 %v277, 7
    %v279 = vsub.s32 0, %v278
    %v280 = vrot.slane %v275, %v279
    %v314 = vunpack.c.l.b16 %v243
    %v315 = vunpack.c.l.b16 %v244
    %v316 = vunpack.c.l.b16 %v245
    %v317 = vunpack.c.l.b16 %v246
    %v318 = vunpack.c.l.b16 %v247
    %v319 = vunpack.c.l.b16 %v248
    %v320 = vunpack.c.l.b16 %v249
    %v321 = vunpack.c.l.b16 %v250
    %v322 = vunpack.c.l.b16 %v251
    %v323 = vunpack.c.l.b16 %v252
    %v324 = vunpack.c.l.b16 %v253
    %v325 = vunpack.c.l.b16 %v254
    %v326 = vunpack.c.l.b16 %v255
    %v327 = vunpack.c.l.b16 %v256
    %v328 = vunpack.c.l.b16 %v257
    %v329 = vunpack.c.l.b16 %v258
    %v330 = vunpack.c.l.b16 %v259
    %v331 = vunpack.c.l.b16 %v260
    %v332 = vunpack.c.l.b16 %v261
    %v333 = vunpack.c.l.b16 %v262
    %v334 = vunpack.c.l.b16 %v263
    %v335 = vunpack.c.l.b16 %v264
    %v336 = vunpack.c.l.b16 %v265
    %v337 = vunpack.c.l.b16 %v266
    %v338 = vunpack.c.l.b16 %v267
    %v339 = vunpack.c.l.b16 %v268
    %v340 = vunpack.c.l.b16 %v269
    %v341 = vunpack.c.l.b16 %v270
    %v342 = vunpack.c.l.b16 %v271
    %v343 = vunpack.c.l.b16 %v272
    %v344 = vunpack.c.l.b16 %v273
    %v345 = vunpack.c.l.b16 %v274
    %v346 = vpack.c.b16 %v315, %v314
    %v347 = vpack.c.b16 %v317, %v316
    %v348 = vpack.c.b16 %v319, %v318
    %v349 = vpack.c.b16 %v321, %v320
    %v350 = vpack.c.b16 %v323, %v322
    %v351 = vpack.c.b16 %v325, %v324
    %v352 = vpack.c.b16 %v327, %v326
    %v353 = vpack.c.b16 %v329, %v328
    %v354 = vpack.c.b16 %v331, %v330
    %v355 = vpack.c.b16 %v333, %v332
    %v356 = vpack.c.b16 %v335, %v334
    %v357 = vpack.c.b16 %v337, %v336
    %v358 = vpack.c.b16 %v339, %v338
    %v359 = vpack.c.b16 %v341, %v340
    %v360 = vpack.c.b16 %v343, %v342
    %v361 = vpack.c.b16 %v345, %v344
    %378 = vmatprep.subr.bf16.mxu0 0
    %379 = vmatpush1.bf16.msra.mxu0 %v346
    %380 = vmatprep.subr.bf16.mxu0 0
    %381 = vmatpush1.bf16.msra.mxu0 %v347
    %382 = vmatprep.subr.bf16.mxu0 0
    %383 = vmatpush1.bf16.msra.mxu0 %v348
    %384 = vmatprep.subr.bf16.mxu0 0
    %385 = vmatpush1.bf16.msra.mxu0 %v349
    %386 = vmatprep.subr.bf16.mxu0 0
    %387 = vmatpush1.bf16.msra.mxu0 %v350
    %388 = vmatprep.subr.bf16.mxu0 0
    %389 = vmatpush1.bf16.msra.mxu0 %v351
    %390 = vmatprep.subr.bf16.mxu0 0
    %391 = vmatpush1.bf16.msra.mxu0 %v352
    %392 = vmatprep.subr.bf16.mxu0 0
    %393 = vmatpush1.bf16.msra.mxu0 %v353
    %394 = vmatprep.subr.bf16.mxu0 0
    %395 = vmatpush1.bf16.msra.mxu0 %v354
    %396 = vmatprep.subr.bf16.mxu0 0
    %397 = vmatpush1.bf16.msra.mxu0 %v355
    %398 = vmatprep.subr.bf16.mxu0 0
    %399 = vmatpush1.bf16.msra.mxu0 %v356
    %400 = vmatprep.subr.bf16.mxu0 0
    %401 = vmatpush1.bf16.msra.mxu0 %v357
    %402 = vmatprep.subr.bf16.mxu0 0
    %403 = vmatpush1.bf16.msra.mxu0 %v358
    %404 = vmatprep.subr.bf16.mxu0 0
    %405 = vmatpush1.bf16.msra.mxu0 %v359
    %406 = vmatprep.subr.bf16.mxu0 0
    %407 = vmatpush1.bf16.msra.mxu0 %v360
    %408 = vmatprep.subr.bf16.mxu0 0
    %409 = vmatpush1.bf16.msra.mxu0 %v361
    %410 = vmatprep.mubr.bf16.mxu0 %v242
    %411 = vmatmul.mubr.bf16.gmra.mrb[0].mxu0 %v241
    %v412 = vpop.f32.mrb[0].mxu0
    %v413 = vadd.f32 %v280, %v412
    %v414 = vpop.f32.mrb[0].mxu0
    %v415 = vpop.f32.mrb[0].mxu0
    %v416 = vpop.f32.mrb[0].mxu0
    %417 = vdwg.mxu0
    %v418 = vmax.f32 %v413, 0.0
    %v419 = vpack.c.bf16 %v418, %v418
    %v420 = vld [vmem:[#allocation8] sm:$0xf]
    %v421 = vld [vmem:[#allocation8 + $0x4] sm:$0xf]
    %v422 = vld [vmem:[#allocation8 + $0x8] sm:$0xf]
    %v423 = vld [vmem:[#allocation8 + $0xc] sm:$0xf]
    %v424 = vld [vmem:[#allocation8 + $0x10] sm:$0xf]
    %v425 = vld [vmem:[#allocation8 + $0x14] sm:$0xf]
    %v426 = vld [vmem:[#allocation8 + $0x18] sm:$0xf]
    %v427 = vld [vmem:[#allocation8 + $0x1c] sm:$0xf]
    %v428 = vld [vmem:[#allocation8 + $0x20] sm:$0xf]
    %v429 = vld [vmem:[#allocation8 + $0x24] sm:$0xf]
    %v430 = vld [vmem:[#allocation8 + $0x28] sm:$0xf]
    %v431 = vld [vmem:[#allocation8 + $0x2c] sm:$0xf]
    %v432 = vld [vmem:[#allocation8 + $0x30] sm:$0xf]
    %v433 = vld [vmem:[#allocation8 + $0x34] sm:$0xf]
    %v434 = vld [vmem:[#allocation8 + $0x38] sm:$0xf]
    %v435 = vld [vmem:[#allocation8 + $0x3c] sm:$0xf]
    %v436 = vld [vmem:[%s6] sm:$0x1]
    %v438 = vlaneseq
    %v439 = vshrl.u32 %v438, 7
    %v440 = vsub.s32 0, %v439
    %v441 = vrot.slane %v436, %v440
    %v459 = vunpack.c.l.b16 %v420
    %v460 = vunpack.c.l.b16 %v421
    %v461 = vunpack.c.l.b16 %v422
    %v462 = vunpack.c.l.b16 %v423
    %v463 = vunpack.c.l.b16 %v424
    %v464 = vunpack.c.l.b16 %v425
    %v465 = vunpack.c.l.b16 %v426
    %v466 = vunpack.c.l.b16 %v427
    %v467 = vunpack.c.l.b16 %v428
    %v468 = vunpack.c.l.b16 %v429
    %v469 = vunpack.c.l.b16 %v430
    %v470 = vunpack.c.l.b16 %v431
    %v471 = vunpack.c.l.b16 %v432
    %v472 = vunpack.c.l.b16 %v433
    %v473 = vunpack.c.l.b16 %v434
    %v474 = vunpack.c.l.b16 %v435
    %v475 = vpack.c.b16 %v460, %v459
    %v476 = vpack.c.b16 %v462, %v461
    %v477 = vpack.c.b16 %v464, %v463
    %v478 = vpack.c.b16 %v466, %v465
    %v479 = vpack.c.b16 %v468, %v467
    %v480 = vpack.c.b16 %v470, %v469
    %v481 = vpack.c.b16 %v472, %v471
    %v482 = vpack.c.b16 %v474, %v473
    %491 = vmatprep.subr.bf16.mxu0 0
    %492 = vmatpush1.bf16.msra.mxu0 %v475
    %493 = vmatprep.subr.bf16.mxu0 0
    %494 = vmatpush1.bf16.msra.mxu0 %v476
    %495 = vmatprep.subr.bf16.mxu0 0
    %496 = vmatpush1.bf16.msra.mxu0 %v477
    %497 = vmatprep.subr.bf16.mxu0 0
    %498 = vmatpush1.bf16.msra.mxu0 %v478
    %499 = vmatprep.subr.bf16.mxu0 0
    %500 = vmatpush1.bf16.msra.mxu0 %v479
    %501 = vmatprep.subr.bf16.mxu0 0
    %502 = vmatpush1.bf16.msra.mxu0 %v480
    %503 = vmatprep.subr.bf16.mxu0 0
    %504 = vmatpush1.bf16.msra.mxu0 %v481
    %505 = vmatprep.subr.bf16.mxu0 0
    %506 = vmatpush1.bf16.msra.mxu0 %v482
    %507 = vmatprep.subr.bf16.mxu0 0
    %508 = vmatpush1.bf16.msra.mxu0 0
    %509 = vmatprep.subr.bf16.mxu0 0
    %510 = vmatpush1.bf16.msra.mxu0 0
    %511 = vmatprep.subr.bf16.mxu0 0
    %512 = vmatpush1.bf16.msra.mxu0 0
    %513 = vmatprep.subr.bf16.mxu0 0
    %514 = vmatpush1.bf16.msra.mxu0 0
    %515 = vmatprep.subr.bf16.mxu0 0
    %516 = vmatpush1.bf16.msra.mxu0 0
    %517 = vmatprep.subr.bf16.mxu0 0
    %518 = vmatpush1.bf16.msra.mxu0 0
    %519 = vmatprep.subr.bf16.mxu0 0
    %520 = vmatpush1.bf16.msra.mxu0 0
    %521 = vmatprep.subr.bf16.mxu0 0
    %522 = vmatpush1.bf16.msra.mxu0 0
    %523 = vmatprep.mubr.bf16.mxu0 0
    %524 = vmatmul.mubr.bf16.gmra.mrb[0].mxu0 %v419
    %v525 = vpop.f32.mrb[0].mxu0
    %v526 = vadd.f32 %v441, %v525
    %v527 = vpop.f32.mrb[0].mxu0
    %v528 = vpop.f32.mrb[0].mxu0
    %v529 = vpop.f32.mrb[0].mxu0
    %530 = vdwg.mxu0
    %v531 = vmax.f32 %v526, 0.0
    %v532 = vld [vmem:[%s7] sm:$0x1]
    %v533 = vunpack.c.l.bf16 %v532
    %v534 = vlaneseq
    %v535 = vshrl.u32 %v534, 7
    %v536 = vsub.s32 0, %v535
    %v537 = vrot.slane %v533, %v536
    %v538 = vmul.f32 %v531, %v537
    %539 = vadd.xlane.f32.xlu0 %v538
    %v540 = vpop.xlane.xlu0 %539
    %v541 = vld [vmem:[#allocation2] sm:$0x1]
    %v543 = vlaneseq
    %v544 = vshrl.u32 %v543, 7
    %v545 = vsub.s32 0, %v544
    %v546 = vrot.slane %v541, %v545
    %v548 = vadd.f32 %v540, %v546
    %vm549 = vcmask 7168
    %550 = vst.msk [vmem:[%s9] sm:$0xff] %vm549, %v548
    // Predicated region
    $region54: #{tpu_custom_call.1} parent=1 // pred_check
      _
    $region55: #{tpu_custom_call.1} parent=1 // pred_check_branch
      %552 = sbr.rel (0) target = $region57
    $region56: #{tpu_custom_call.1} parent=1 // pred_region
      _
    $region57: #{tpu_custom_call.1} parent=1 // pred_fallthru
      _
    // Predicated region
    $region58: #{tpu_custom_call.1} parent=1 // pred_check
      _
    $region59: #{tpu_custom_call.1} parent=1 // pred_check_branch
      %554 = sbr.rel (0) target = $region61
    $region60: #{tpu_custom_call.1} parent=1 // pred_region
      _
    $region61: #{tpu_custom_call.1} parent=1 // pred_fallthru
      _
    %555 = vsyncpa [#allocation4], 1
    %556 = vsyncpa [#allocation6], 1
    %557 = vsyncpa [#allocation9], 1

</llo_original>
